<compile_context>
chip_gen: v5e
topology: v5e:2x2
jax: 0.10.0
libtpu: 0.0.40
codegen_flags: <defaults>
</compile_context>

<pallas_src>
import math

import jax
import jax.numpy as jnp
from jax.experimental import pallas as pl
from jax.experimental.pallas import tpu as pltpu

_SUBLANE = 8
_BLOCK_B = 8192   # rows per grid step on the large-batch path (sweep 2048-8192)


def _fused_linear_kernel(x_ref, w_ref, b_ref, o_ref):
    # Single fused linear over all classifier heads:
    #   o = x @ W_cat + b_cat   (W_cat already transposed: [F, N])
    acc = jnp.dot(x_ref[...], w_ref[...], preferred_element_type=jnp.float32)  # MXU
    o_ref[...] = (acc + b_ref[...]).astype(o_ref.dtype)


def fused_classifier_pallas(x, w_cat, b_cat, *, block_b=_BLOCK_B):
    """Packed logits = x @ w_cat + b_cat.

    x:     [B, F]  f32
    w_cat: [F, N]  f32  (N = sum of per-head class counts, no padding)
    b_cat: [1, N]  f32
    returns [B, N] f32 (packed; caller may view per-head columns).
    """
    B, F = x.shape
    Fw, N = w_cat.shape
    assert F == Fw and b_cat.shape == (1, N)

    if B <= block_b:
        # Small batch: grid-less single-tile call, whole operands in VMEM.
        # (For tiny B a plain jnp.dot would also be fine; kept as a kernel here.)
        return pl.pallas_call(
            _fused_linear_kernel,
            out_shape=jax.ShapeDtypeStruct((B, N), x.dtype),
        )(x, w_cat, b_cat)

    # Large batch: grid only over B; exact out_shape, ragged last block is
    # masked by Pallas (no wrapper-side pad/slice HBM round trips).
    assert block_b % _SUBLANE == 0
    grid_b = pl.cdiv(B, block_b)
    return pl.pallas_call(
        _fused_linear_kernel,
        out_shape=jax.ShapeDtypeStruct((B, N), x.dtype),
        grid=(grid_b,),
        in_specs=[
            pl.BlockSpec((block_b, F), lambda i: (i, 0)),
            pl.BlockSpec((F, N), lambda i: (0, 0)),   # VMEM-resident across steps
            pl.BlockSpec((1, N), lambda i: (0, 0)),
        ],
        out_specs=pl.BlockSpec((block_b, N), lambda i: (i, 0)),
        compiler_params=pltpu.CompilerParams(
            dimension_semantics=("parallel",),      # shards across TCs on v7x
            vmem_limit_bytes=32 << 20,              # headroom (v5e default is 16 MiB)
        ),
    )(x, w_cat, b_cat)


def init_classifier_params(key, out_features, architecture):
    """Deterministic init mimicking nn.Linear default (uniform +/- 1/sqrt(fan_in))."""
    params = []
    for idx, nc in enumerate(architecture):
        kw, kb = jax.random.split(jax.random.fold_in(key, idx))
        bound = 1.0 / math.sqrt(out_features)
        # PyTorch weight is (nc, out_features); store transposed (out_features, nc).
        w_t = jax.random.uniform(
            kw, (out_features, nc), minval=-bound, maxval=bound, dtype=jnp.float32
        )
        b = jax.random.uniform(
            kb, (1, nc), minval=-bound, maxval=bound, dtype=jnp.float32
        )
        params.append((w_t, b))
    return params


def pack_classifier_params(params):
    """Concatenate per-head (w_t, b) along the class axis.  Run ONCE at init,
    not inside the jitted forward."""
    head_sizes = [w.shape[1] for (w, _) in params]
    w_cat = jnp.concatenate([w for (w, _) in params], axis=1)   # [F, sum(nc)]
    b_cat = jnp.concatenate([b for (_, b) in params], axis=1)   # [1, sum(nc)]
    return w_cat, b_cat, head_sizes


def classifier_module_forward(features, w_cat, b_cat, head_sizes):
    """Equivalent of ClassifierModule.forward: list of per-head logits.

    Downstream consumers that can work on the packed [B, sum(nc)] layout
    should use fused_classifier_pallas directly and skip this unpack."""
    packed = fused_classifier_pallas(features, w_cat, b_cat)   # [B, sum(nc)]
    outs, off = [], 0
    for nc in head_sizes:
        outs.append(packed[:, off:off + nc])
        off += nc
    return outs


# TODO(synk): in a full model, fold this fused matmul into (or cross-call
# prefetch against) the producer of `features` to avoid the extra HBM round
# trip — not expressible in this standalone module.


if __name__ == "__main__":
    key = jax.random.PRNGKey(0)
    k_feat, k_params, k_big = jax.random.split(key, 3)

    batch = 8
    out_features = 32              # feature dim coming into the classifiers
    architecture = [10, 6, 4]      # number of classes per taxonomic level

    features = jax.random.normal(k_feat, (batch, out_features), dtype=jnp.float32)
    params = init_classifier_params(k_params, out_features, architecture)
    w_cat, b_cat, head_sizes = pack_classifier_params(params)

    # --- small-batch (grid-less fused) path ---
    outs = classifier_module_forward(features, w_cat, b_cat, head_sizes)
    outs = [jax.block_until_ready(o) for o in outs]
    for (w_t, b), o in zip(params, outs):
        ref = features @ w_t + b
        assert o.shape == ref.shape
        assert jnp.allclose(o, ref, atol=1e-5, rtol=1e-5)

    # --- large-batch (B-tiled) path, ragged last block ---
    big_batch = 1000               # deliberately not a multiple of block_b
    big_features = jax.random.normal(
        k_big, (big_batch, out_features), dtype=jnp.float32
    )
    big_packed = fused_classifier_pallas(big_features, w_cat, b_cat, block_b=256)
    big_packed = jax.block_until_ready(big_packed)
    off = 0
    for (w_t, b) in params:
        nc = w_t.shape[1]
        ref = big_features @ w_t + b
        o = big_packed[:, off:off + nc]
        assert o.shape == ref.shape
        assert jnp.allclose(o, ref, atol=1e-5, rtol=1e-5)
        off += nc

    print("KERNEL_OK")
</pallas_src>

<mosaic_0001>
module attributes {stable_mosaic.version = 11 : i64} {
  func.func @_fused_linear_kernel(%arg0: memref<8x32xf32, #tpu.memory_space<vmem>>, %arg1: memref<32x20xf32, #tpu.memory_space<vmem>>, %arg2: memref<1x20xf32, #tpu.memory_space<vmem>>, %arg3: memref<8x20xf32, #tpu.memory_space<vmem>>) attributes {dimension_semantics = [], scalar_prefetch = 0 : i64, scratch_operands = 0 : i64, tpu.core_type = #tpu.core_type<tc>} {
    %c0 = arith.constant 0 : index
    %c0_0 = arith.constant 0 : index
    %0 = vector.load %arg0[%c0, %c0_0] : memref<8x32xf32, #tpu.memory_space<vmem>>, vector<8x32xf32>
    %c0_1 = arith.constant 0 : index
    %c0_2 = arith.constant 0 : index
    %1 = vector.load %arg1[%c0_1, %c0_2] : memref<32x20xf32, #tpu.memory_space<vmem>>, vector<32x20xf32>
    %cst = arith.constant dense<0.000000e+00> : vector<8x20xf32>
    %2 = tpu.matmul %0, %1, %cst {dimension_numbers = #tpu.dot_dimension_numbers<[1], [0], [0], [1], [0, 0, 1, 1], [], []>} : vector<8x32xf32>, vector<32x20xf32>, vector<8x20xf32> -> vector<8x20xf32>
    %c0_3 = arith.constant 0 : index
    %c0_4 = arith.constant 0 : index
    %3 = vector.load %arg2[%c0_3, %c0_4] : memref<1x20xf32, #tpu.memory_space<vmem>>, vector<1x20xf32>
    %4 = vector.broadcast %3 : vector<1x20xf32> to vector<8x20xf32>
    %5 = arith.addf %2, %4 : vector<8x20xf32>
    %c0_5 = arith.constant 0 : index
    %c0_6 = arith.constant 0 : index
    %6 = vector.load %arg3[%c0_5, %c0_6] : memref<8x20xf32, #tpu.memory_space<vmem>>, vector<8x20xf32>
    tpu.vector_store %arg3[%c0_5, %c0_6], %5 {strides = array<i32>} : memref<8x20xf32, #tpu.memory_space<vmem>>, vector<8x20xf32>,
    return
  }
}

</mosaic_0001>

<llo_original>
// kernel: tpu_custom_call.1
$region0: #{tpu_custom_call.1}
  #allocation0 [shape = 'u32[]', space=smem, size = 0x4, offset = 0x4, fixed_abs, tag = 'smem constant byte address 0x4 - core index']
  #allocation1 [shape = 'u32[72,128]{1,0:T(1,128)}', space=vmem, size = 0x9000, scoped, tag = 'internal scratch']
  %s0 = inlined_call_operand.vmem [shape: f32[8,32], index: 0, kind: input, shape index: {}]
  %s1 = inlined_call_operand.vmem [shape: f32[32,20], index: 1, kind: input, shape index: {}]
  %s2 = inlined_call_operand.vmem [shape: f32[1,20], index: 2, kind: input, shape index: {}]
  %s3 = inlined_call_operand.hbm [shape: f32[8,20], index: 3, kind: output, shape index: {}]
  %s4 = sld [smem:[#allocation0]]
  $region22: #{tpu_custom_call.1} parent=0
    _
  %s6 = ssub.s32 1, %s4
  %s7 = scalar_select 0, %s6, %s4
  $region1: #{tpu_custom_call.1} parent=0
    #allocation2 [shape = 'u8[4096]{0}', space=vmem, size = 0x1000, scoped, tag = 'output window, operand 0, single buffered']
    #allocation3 [shape = 's32[1]{0}', space=sflag, size = 0x4, scoped, tag = 'scoped memory for tpu_custom_call.1']
    %8 = vsyncpa [#allocation3], 0
    // Predicated region
    $region2: #{tpu_custom_call.1} parent=1 // pred_check
      _
    $region3: #{tpu_custom_call.1} parent=1 // pred_check_branch
      %10 = sbr.rel (0) target = $region5
    $region4: #{tpu_custom_call.1} parent=1 // pred_region
      _
    $region5: #{tpu_custom_call.1} parent=1 // pred_fallthru
      _
    // Predicated region
    $region6: #{tpu_custom_call.1} parent=1 // pred_check
      _
    $region7: #{tpu_custom_call.1} parent=1 // pred_check_branch
      %12 = sbr.rel (0) target = $region9
    $region8: #{tpu_custom_call.1} parent=1 // pred_region
      _
    $region9: #{tpu_custom_call.1} parent=1 // pred_fallthru
      _
    // Predicated region
    $region10: #{tpu_custom_call.1} parent=1 // pred_check
      _
    $region11: #{tpu_custom_call.1} parent=1 // pred_check_branch
      %14 = sbr.rel (0) target = $region13
    $region12: #{tpu_custom_call.1} parent=1 // pred_region
      _
    $region13: #{tpu_custom_call.1} parent=1 // pred_fallthru
      _
    %v15 = vld [vmem:[%s0] sm:$0xff]
    %v16 = vld [vmem:[%s1] sm:$0xff]
    %v17 = vld [vmem:[%s1 + $0x8] sm:$0xff]
    %v18 = vld [vmem:[%s1 + $0x10] sm:$0xff]
    %v19 = vld [vmem:[%s1 + $0x18] sm:$0xff]
    %v20 = vld [vmem:[%s2] sm:$0x1]
    %v22 = vperm.slane %v20, 0
    %vm24 = vcmask 261120
    %v26 = vsel %vm24, %v15, 0
    %28 = vmatpush.msra.mxu0 0.0
    %29 = vmatpush.msra.mxu0 0.0
    %30 = vmatpush.msra.mxu0 0.0
    %31 = vmatpush.msra.mxu0 0.0
    %32 = vmatpush.msra.mxu0 0.0
    %33 = vmatpush.msra.mxu0 0.0
    %34 = vmatpush.msra.mxu0 0.0
    %35 = vmatpush.msra.mxu0 0.0
    %36 = vmatpush.msra.mxu0 0.0
    %37 = vmatpush.msra.mxu0 0.0
    %38 = vmatpush.msra.mxu0 0.0
    %39 = vmatpush.msra.mxu0 0.0
    %40 = vmatpush.msra.mxu0 %v19
    %41 = vmatpush.msra.mxu0 %v18
    %42 = vmatpush.msra.mxu0 %v17
    %43 = vmatpush.msra.mxu0 %v16
    %44 = vmatmul.f32.gmra.mxu0 %v26
    %v45 = vpop.f32.mrf.mxu0
    %v46 = vadd.f32 %v22, %v45
    %47 = vdwg.mxu0
    %vm48 = vcmask 162816
    %49 = vst.msk [vmem:[#allocation2] sm:$0xff] %vm48, %v46
    // Predicated region
    $region14: #{tpu_custom_call.1} parent=1 // pred_check
      _
    $region15: #{tpu_custom_call.1} parent=1 // pred_check_branch
      %51 = sbr.rel (0) target = $region17
    $region16: #{tpu_custom_call.1} parent=1 // pred_region
      %53 = vsyncadd [#allocation3], 0
      %s55 = sshll.u32 [#allocation2], 4
      %s56 = int_to_ptr.vmem [resolvable:$true] %s55
      %s57 = sshll.u32 %s3, 4
      %s58 = int_to_ptr.hbm [resolvable:$true] %s57
      %60 = dma.vmem_to_hbm [thread:$0]  %s56, 128, %s58, [#allocation3]
    $region17: #{tpu_custom_call.1} parent=1 // pred_fallthru
      _
    // Predicated region
    $region18: #{tpu_custom_call.1} parent=1 // pred_check
      _
    $region19: #{tpu_custom_call.1} parent=1 // pred_check_branch
      %62 = sbr.rel (0) target = $region21
    $region20: #{tpu_custom_call.1} parent=1 // pred_region
      %64 = dma.done [#allocation3], 128
    $region21: #{tpu_custom_call.1} parent=1 // pred_fallthru
      _
    %65 = vsyncpa [#allocation3], 1

</llo_original>
